<compile_context>
chip_gen: v7x
topology: tpu7x:2x2x1
jax: 0.10.0
libtpu: 0.0.40
codegen_flags: <defaults>
</compile_context>

<pallas_src>
import functools

import jax
import jax.numpy as jnp
from jax.experimental import pallas as pl
from jax.experimental.pallas import tpu as pltpu

HIDDEN = 128


def mlp_kernel(x_ref, w1_ref, b1_ref, w2_ref, b2_ref, w3_ref, b3_ref,
               w4_ref, b4_ref, o_ref):
    # Layer 1: bf16 matmul on MXU, f32 accumulate, f32 bias + ReLU.
    h = jnp.dot(x_ref[...], w1_ref[...], preferred_element_type=jnp.float32)
    h = jnp.maximum(h + b1_ref[...], 0.0)
    # Layer 2
    h = jnp.dot(h.astype(jnp.bfloat16), w2_ref[...],
                preferred_element_type=jnp.float32)
    h = jnp.maximum(h + b2_ref[...], 0.0)
    # Layer 3
    h = jnp.dot(h.astype(jnp.bfloat16), w3_ref[...],
                preferred_element_type=jnp.float32)
    h = jnp.maximum(h + b3_ref[...], 0.0)
    # Layer 4: Linear, no activation.
    h = jnp.dot(h.astype(jnp.bfloat16), w4_ref[...],
                preferred_element_type=jnp.float32)
    o_ref[...] = (h + b4_ref[...]).astype(o_ref.dtype)


def pack_params(params):
    """One-time packing of PyTorch-style params (W:(out,in), b:(out,)) into
    kernel layout: W^T in bf16 (in,out) and bias as f32 (1,out)."""
    packed = []
    for (w, b) in params:
        packed.append(jnp.transpose(w).astype(jnp.bfloat16))
        packed.append(b.reshape(1, HIDDEN).astype(jnp.float32))
    return packed


def _round_up(n, m):
    return ((n + m - 1) // m) * m


@functools.partial(jax.jit, static_argnames=("tb",))
def neural_network_forward(x, packed_params, *, tb=256):
    """x: (B, ...) with prod(...) == 128. packed_params: output of pack_params."""
    B = x.shape[0]
    x_flat = x.reshape(B, -1)
    assert x_flat.shape[1] == HIDDEN

    # Pad batch to a multiple of 8 sublanes, then to a multiple of the tile.
    b_pad = _round_up(B, 8)
    tile_b = min(tb, b_pad)
    b_pad = _round_up(b_pad, tile_b)
    if b_pad != B:
        x_flat = jnp.pad(x_flat, ((0, b_pad - B), (0, 0)))
    x_bf16 = x_flat.astype(jnp.bfloat16)

    n_tiles = b_pad // tile_b

    x_spec = pl.BlockSpec((tile_b, HIDDEN), lambda i: (i, 0))
    w_spec = pl.BlockSpec((HIDDEN, HIDDEN), lambda i: (0, 0))   # weight-stationary
    bias_spec = pl.BlockSpec((1, HIDDEN), lambda i: (0, 0))
    out_spec = pl.BlockSpec((tile_b, HIDDEN), lambda i: (i, 0))

    in_specs = [x_spec]
    for _ in range(4):
        in_specs.append(w_spec)
        in_specs.append(bias_spec)

    flops = 4 * 2 * b_pad * HIDDEN * HIDDEN
    bytes_accessed = (b_pad * HIDDEN * 2            # x (bf16)
                      + 4 * HIDDEN * HIDDEN * 2     # weights (bf16)
                      + 4 * HIDDEN * 4              # biases (f32)
                      + b_pad * HIDDEN * 4)         # out (f32)

    out = pl.pallas_call(
        mlp_kernel,
        out_shape=jax.ShapeDtypeStruct((b_pad, HIDDEN), jnp.float32),
        grid=(n_tiles,),
        in_specs=in_specs,
        out_specs=out_spec,
        compiler_params=pltpu.CompilerParams(
            dimension_semantics=("parallel",)),
        cost_estimate=pl.CostEstimate(
            flops=flops, transcendentals=0, bytes_accessed=bytes_accessed),
    )(x_bf16, *packed_params)

    return out[:B]


def init_params(key):
    """Deterministic init matching PyTorch Linear shapes:
    W: (out_features, in_features), b: (out_features,)."""
    params = []
    for _ in range(4):
        kw, kb, key = jax.random.split(key, 3)
        bound = 1.0 / jnp.sqrt(HIDDEN)
        w = jax.random.uniform(kw, (HIDDEN, HIDDEN), jnp.float32, -bound, bound)
        b = jax.random.uniform(kb, (HIDDEN,), jnp.float32, -bound, bound)
        params.append((w, b))
    return params


def reference_forward_f32(x, params):
    """Exact f32 PyTorch-equivalent forward."""
    h = x.reshape(x.shape[0], -1).astype(jnp.float32)
    for i, (w, b) in enumerate(params):
        h = h @ w.T + b
        if i < 3:
            h = jnp.maximum(h, 0.0)
    return h


def reference_forward_bf16(x, params):
    """Mirrors the kernel's mixed precision (bf16 operands, f32 accumulate)."""
    h = x.reshape(x.shape[0], -1).astype(jnp.bfloat16)
    for i, (w, b) in enumerate(params):
        h = jnp.dot(h, jnp.transpose(w).astype(jnp.bfloat16),
                    preferred_element_type=jnp.float32) + b
        if i < 3:
            h = jnp.maximum(h, 0.0).astype(jnp.bfloat16)
    return h


if __name__ == "__main__":
    key = jax.random.PRNGKey(0)
    kx, kp = jax.random.split(key)
    # Input: batch=2, shaped (2, 8, 16) -> flattens to (2, 128)
    x = jax.random.normal(kx, (2, 8, 16), jnp.float32)
    params = init_params(kp)

    packed = pack_params(params)           # one-time packing, outside hot path
    out = neural_network_forward(x, packed)
    out = jax.block_until_ready(out)
    assert out.shape == (2, HIDDEN)

    # Tight check vs a reference using the same bf16/f32 mixed precision.
    ref_bf16 = reference_forward_bf16(x, params)
    assert jnp.allclose(out, ref_bf16, atol=1e-3, rtol=1e-3)

    # Loose check vs the exact f32 PyTorch semantics (bf16 weight quantization).
    ref_f32 = reference_forward_f32(x, params)
    assert jnp.allclose(out, ref_f32, atol=5e-2, rtol=5e-2)

    print("KERNEL_OK")
</pallas_src>

<mosaic_0001>
module attributes {stable_mosaic.version = 11 : i64} {
  func.func @mlp_kernel(%arg0: i32, %arg1: memref<8x128xbf16, #tpu.memory_space<vmem>>, %arg2: memref<128x128xbf16, #tpu.memory_space<vmem>>, %arg3: memref<1x128xf32, #tpu.memory_space<vmem>>, %arg4: memref<128x128xbf16, #tpu.memory_space<vmem>>, %arg5: memref<1x128xf32, #tpu.memory_space<vmem>>, %arg6: memref<128x128xbf16, #tpu.memory_space<vmem>>, %arg7: memref<1x128xf32, #tpu.memory_space<vmem>>, %arg8: memref<128x128xbf16, #tpu.memory_space<vmem>>, %arg9: memref<1x128xf32, #tpu.memory_space<vmem>>, %arg10: memref<8x128xf32, #tpu.memory_space<vmem>>) attributes {dimension_semantics = [#tpu.dimension_semantics<parallel>], iteration_bounds = array<i64: 1>, scalar_prefetch = 0 : i64, scratch_operands = 0 : i64, tpu.core_type = #tpu.core_type<tc>, window_params = [{transform_indices = @transform_0, window_bounds = array<i64: 8, 128>}, {pipeline_mode = #tpu.pipeline_mode<synchronous>, transform_indices = @transform_1, window_bounds = array<i64: 128, 128>}, {pipeline_mode = #tpu.pipeline_mode<synchronous>, transform_indices = @transform_2, window_bounds = array<i64: 1, 128>}, {pipeline_mode = #tpu.pipeline_mode<synchronous>, transform_indices = @transform_3, window_bounds = array<i64: 128, 128>}, {pipeline_mode = #tpu.pipeline_mode<synchronous>, transform_indices = @transform_4, window_bounds = array<i64: 1, 128>}, {pipeline_mode = #tpu.pipeline_mode<synchronous>, transform_indices = @transform_5, window_bounds = array<i64: 128, 128>}, {pipeline_mode = #tpu.pipeline_mode<synchronous>, transform_indices = @transform_6, window_bounds = array<i64: 1, 128>}, {pipeline_mode = #tpu.pipeline_mode<synchronous>, transform_indices = @transform_7, window_bounds = array<i64: 128, 128>}, {pipeline_mode = #tpu.pipeline_mode<synchronous>, transform_indices = @transform_8, window_bounds = array<i64: 1, 128>}, {transform_indices = @transform_9, window_bounds = array<i64: 8, 128>}]} {
    %c0 = arith.constant 0 : index
    %c0_0 = arith.constant 0 : index
    %0 = vector.load %arg1[%c0, %c0_0] : memref<8x128xbf16, #tpu.memory_space<vmem>>, vector<8x128xbf16>
    %c0_1 = arith.constant 0 : index
    %c0_2 = arith.constant 0 : index
    %1 = vector.load %arg2[%c0_1, %c0_2] : memref<128x128xbf16, #tpu.memory_space<vmem>>, vector<128x128xbf16>
    %cst = arith.constant dense<0.000000e+00> : vector<8x128xf32>
    %2 = tpu.matmul %0, %1, %cst {dimension_numbers = #tpu.dot_dimension_numbers<[1], [0], [0], [1], [0, 0, 1, 1], [], []>} : vector<8x128xbf16>, vector<128x128xbf16>, vector<8x128xf32> -> vector<8x128xf32>
    %c0_3 = arith.constant 0 : index
    %c0_4 = arith.constant 0 : index
    %3 = vector.load %arg3[%c0_3, %c0_4] : memref<1x128xf32, #tpu.memory_space<vmem>>, vector<1x128xf32>
    %4 = vector.broadcast %3 : vector<1x128xf32> to vector<8x128xf32>
    %5 = arith.addf %2, %4 : vector<8x128xf32>
    %cst_5 = arith.constant 0.000000e+00 : f32
    %6 = vector.broadcast %cst_5 : f32 to vector<8x128xf32>
    %7 = arith.maximumf %5, %6 : vector<8x128xf32>
    %8 = arith.truncf %7 : vector<8x128xf32> to vector<8x128xbf16>
    %c0_6 = arith.constant 0 : index
    %c0_7 = arith.constant 0 : index
    %9 = vector.load %arg4[%c0_6, %c0_7] : memref<128x128xbf16, #tpu.memory_space<vmem>>, vector<128x128xbf16>
    %cst_8 = arith.constant dense<0.000000e+00> : vector<8x128xf32>
    %10 = tpu.matmul %8, %9, %cst_8 {dimension_numbers = #tpu.dot_dimension_numbers<[1], [0], [0], [1], [0, 0, 1, 1], [], []>} : vector<8x128xbf16>, vector<128x128xbf16>, vector<8x128xf32> -> vector<8x128xf32>
    %c0_9 = arith.constant 0 : index
    %c0_10 = arith.constant 0 : index
    %11 = vector.load %arg5[%c0_9, %c0_10] : memref<1x128xf32, #tpu.memory_space<vmem>>, vector<1x128xf32>
    %12 = vector.broadcast %11 : vector<1x128xf32> to vector<8x128xf32>
    %13 = arith.addf %10, %12 : vector<8x128xf32>
    %cst_11 = arith.constant 0.000000e+00 : f32
    %14 = vector.broadcast %cst_11 : f32 to vector<8x128xf32>
    %15 = arith.maximumf %13, %14 : vector<8x128xf32>
    %16 = arith.truncf %15 : vector<8x128xf32> to vector<8x128xbf16>
    %c0_12 = arith.constant 0 : index
    %c0_13 = arith.constant 0 : index
    %17 = vector.load %arg6[%c0_12, %c0_13] : memref<128x128xbf16, #tpu.memory_space<vmem>>, vector<128x128xbf16>
    %cst_14 = arith.constant dense<0.000000e+00> : vector<8x128xf32>
    %18 = tpu.matmul %16, %17, %cst_14 {dimension_numbers = #tpu.dot_dimension_numbers<[1], [0], [0], [1], [0, 0, 1, 1], [], []>} : vector<8x128xbf16>, vector<128x128xbf16>, vector<8x128xf32> -> vector<8x128xf32>
    %c0_15 = arith.constant 0 : index
    %c0_16 = arith.constant 0 : index
    %19 = vector.load %arg7[%c0_15, %c0_16] : memref<1x128xf32, #tpu.memory_space<vmem>>, vector<1x128xf32>
    %20 = vector.broadcast %19 : vector<1x128xf32> to vector<8x128xf32>
    %21 = arith.addf %18, %20 : vector<8x128xf32>
    %cst_17 = arith.constant 0.000000e+00 : f32
    %22 = vector.broadcast %cst_17 : f32 to vector<8x128xf32>
    %23 = arith.maximumf %21, %22 : vector<8x128xf32>
    %24 = arith.truncf %23 : vector<8x128xf32> to vector<8x128xbf16>
    %c0_18 = arith.constant 0 : index
    %c0_19 = arith.constant 0 : index
    %25 = vector.load %arg8[%c0_18, %c0_19] : memref<128x128xbf16, #tpu.memory_space<vmem>>, vector<128x128xbf16>
    %cst_20 = arith.constant dense<0.000000e+00> : vector<8x128xf32>
    %26 = tpu.matmul %24, %25, %cst_20 {dimension_numbers = #tpu.dot_dimension_numbers<[1], [0], [0], [1], [0, 0, 1, 1], [], []>} : vector<8x128xbf16>, vector<128x128xbf16>, vector<8x128xf32> -> vector<8x128xf32>
    %c0_21 = arith.constant 0 : index
    %c0_22 = arith.constant 0 : index
    %27 = vector.load %arg9[%c0_21, %c0_22] : memref<1x128xf32, #tpu.memory_space<vmem>>, vector<1x128xf32>
    %28 = vector.broadcast %27 : vector<1x128xf32> to vector<8x128xf32>
    %29 = arith.addf %26, %28 : vector<8x128xf32>
    %c0_23 = arith.constant 0 : index
    %c0_24 = arith.constant 0 : index
    %30 = vector.load %arg10[%c0_23, %c0_24] : memref<8x128xf32, #tpu.memory_space<vmem>>, vector<8x128xf32>
    tpu.vector_store %arg10[%c0_23, %c0_24], %29 {strides = array<i32>} : memref<8x128xf32, #tpu.memory_space<vmem>>, vector<8x128xf32>,
    return
  }
  func.func @transform_0(%arg0: i32) -> (i32, i32) {
    %c0_i32 = arith.constant 0 : i32
    %c0_i32_0 = arith.constant 0 : i32
    return %arg0, %c0_i32 : i32, i32
  }
  func.func @transform_1(%arg0: i32) -> (i32, i32) {
    %c0_i32 = arith.constant 0 : i32
    %c0_i32_0 = arith.constant 0 : i32
    %c0_i32_1 = arith.constant 0 : i32
    return %c0_i32, %c0_i32_0 : i32, i32
  }
  func.func @transform_2(%arg0: i32) -> (i32, i32) {
    %c0_i32 = arith.constant 0 : i32
    %c0_i32_0 = arith.constant 0 : i32
    %c0_i32_1 = arith.constant 0 : i32
    return %c0_i32, %c0_i32_0 : i32, i32
  }
  func.func @transform_3(%arg0: i32) -> (i32, i32) {
    %c0_i32 = arith.constant 0 : i32
    %c0_i32_0 = arith.constant 0 : i32
    %c0_i32_1 = arith.constant 0 : i32
    return %c0_i32, %c0_i32_0 : i32, i32
  }
  func.func @transform_4(%arg0: i32) -> (i32, i32) {
    %c0_i32 = arith.constant 0 : i32
    %c0_i32_0 = arith.constant 0 : i32
    %c0_i32_1 = arith.constant 0 : i32
    return %c0_i32, %c0_i32_0 : i32, i32
  }
  func.func @transform_5(%arg0: i32) -> (i32, i32) {
    %c0_i32 = arith.constant 0 : i32
    %c0_i32_0 = arith.constant 0 : i32
    %c0_i32_1 = arith.constant 0 : i32
    return %c0_i32, %c0_i32_0 : i32, i32
  }
  func.func @transform_6(%arg0: i32) -> (i32, i32) {
    %c0_i32 = arith.constant 0 : i32
    %c0_i32_0 = arith.constant 0 : i32
    %c0_i32_1 = arith.constant 0 : i32
    return %c0_i32, %c0_i32_0 : i32, i32
  }
  func.func @transform_7(%arg0: i32) -> (i32, i32) {
    %c0_i32 = arith.constant 0 : i32
    %c0_i32_0 = arith.constant 0 : i32
    %c0_i32_1 = arith.constant 0 : i32
    return %c0_i32, %c0_i32_0 : i32, i32
  }
  func.func @transform_8(%arg0: i32) -> (i32, i32) {
    %c0_i32 = arith.constant 0 : i32
    %c0_i32_0 = arith.constant 0 : i32
    %c0_i32_1 = arith.constant 0 : i32
    return %c0_i32, %c0_i32_0 : i32, i32
  }
  func.func @transform_9(%arg0: i32) -> (i32, i32) {
    %c0_i32 = arith.constant 0 : i32
    %c0_i32_0 = arith.constant 0 : i32
    return %arg0, %c0_i32 : i32, i32
  }
}

</mosaic_0001>

<llo_original>
// kernel: neural_network_forward.1
$region0: #{neural_network_forward.1}
  #allocation0 [shape = 'u32[]', space=smem, size = 0x4, offset = 0x4, fixed_abs, tag = 'smem constant byte address 0x4 - core index']
  #allocation1 [shape = 'u32[144,128]{1,0:T(1,128)}', space=vmem, size = 0x12000, scoped, tag = 'internal scratch']
  %s0 = inlined_call_operand.vmem [shape: bf16[8,128], index: 0, kind: input, shape index: {}]
  %s1 = inlined_call_operand.hbm [shape: bf16[128,128], index: 1, kind: input, shape index: {}]
  %s2 = inlined_call_operand.vmem [shape: f32[1,128], index: 2, kind: input, shape index: {}]
  %s3 = inlined_call_operand.hbm [shape: bf16[128,128], index: 3, kind: input, shape index: {}]
  %s4 = inlined_call_operand.hbm [shape: f32[1,128], index: 4, kind: input, shape index: {}]
  %s5 = inlined_call_operand.hbm [shape: bf16[128,128], index: 5, kind: input, shape index: {}]
  %s6 = inlined_call_operand.hbm [shape: f32[1,128], index: 6, kind: input, shape index: {}]
  %s7 = inlined_call_operand.vmem [shape: bf16[128,128], index: 7, kind: input, shape index: {}]
  %s8 = inlined_call_operand.vmem [shape: f32[1,128], index: 8, kind: input, shape index: {}]
  %s9 = inlined_call_operand.vmem [shape: f32[8,128], index: 9, kind: output, shape index: {}]
  %s10 = sld [smem:[#allocation0]]
  $region66: #{neural_network_forward.1} parent=0
    _
  %s12 = ssub.s32 1, %s10
  %s13 = scalar_select 0, %s12, %s10
  $region1: #{neural_network_forward.1} parent=0
    #allocation2 [shape = 'u8[32768]{0}', space=vmem, size = 0x8000, scoped, tag = 'input window, operand 1, single buffered']
    #allocation3 [shape = 's32[1]{0}', space=sflag, size = 0x4, scoped, tag = 'scoped memory for neural_network_forward.1']
    #allocation4 [shape = 'u8[32768]{0}', space=vmem, size = 0x8000, scoped, tag = 'input window, operand 3, single buffered']
    #allocation5 [shape = 's32[1]{0}', space=sflag, size = 0x4, scoped, tag = 'scoped memory for neural_network_forward.1']
    #allocation6 [shape = 'u8[512]{0}', space=vmem, size = 0x400, scoped, tag = 'input window, operand 4, single buffered']
    #allocation7 [shape = 'u8[32768]{0}', space=vmem, size = 0x8000, scoped, tag = 'input window, operand 5, single buffered']
    #allocation8 [shape = 's32[1]{0}', space=sflag, size = 0x4, scoped, tag = 'scoped memory for neural_network_forward.1']
    #allocation9 [shape = 'u8[512]{0}', space=vmem, size = 0x400, scoped, tag = 'input window, operand 6, single buffered']
    %14 = vsyncpa [#allocation3], 0
    %15 = vsyncpa [#allocation5], 0
    %16 = vsyncpa [#allocation8], 0
    // Predicated region
    $region2: #{neural_network_forward.1} parent=1 // pred_check
      _
    $region3: #{neural_network_forward.1} parent=1 // pred_check_branch
      %18 = sbr.rel (0) target = $region5
    $region4: #{neural_network_forward.1} parent=1 // pred_region
      _
    $region5: #{neural_network_forward.1} parent=1 // pred_fallthru
      _
    // Predicated region
    $region6: #{neural_network_forward.1} parent=1 // pred_check
      _
    $region7: #{neural_network_forward.1} parent=1 // pred_check_branch
      %20 = sbr.rel (0) target = $region9
    $region8: #{neural_network_forward.1} parent=1 // pred_region
      %s22 = ssub.s32 1024, 1024
      %23 = vsyncadd [#allocation3], %s22
      %s24 = sshll.u32 [#allocation2], 4
      %s25 = int_to_ptr.vmem [resolvable:$true] %s24
      %30 = dma.hbm_to_vmem [thread:$0]  %s1, 1024, %s25, [#allocation3], 64, 64, 4
    $region9: #{neural_network_forward.1} parent=1 // pred_fallthru
      _
    // Predicated region
    $region10: #{neural_network_forward.1} parent=1 // pred_check
      _
    $region11: #{neural_network_forward.1} parent=1 // pred_check_branch
      %32 = sbr.rel (0) target = $region13
    $region12: #{neural_network_forward.1} parent=1 // pred_region
      _
    $region13: #{neural_network_forward.1} parent=1 // pred_fallthru
      _
    // Predicated region
    $region14: #{neural_network_forward.1} parent=1 // pred_check
      _
    $region15: #{neural_network_forward.1} parent=1 // pred_check_branch
      %34 = sbr.rel (0) target = $region17
    $region16: #{neural_network_forward.1} parent=1 // pred_region
      %s36 = ssub.s32 1024, 1024
      %37 = vsyncadd [#allocation5], %s36
      %s38 = sshll.u32 [#allocation4], 4
      %s39 = int_to_ptr.vmem [resolvable:$true] %s38
      %44 = dma.hbm_to_vmem [thread:$0]  %s3, 1024, %s39, [#allocation5], 64, 64, 4
    $region17: #{neural_network_forward.1} parent=1 // pred_fallthru
      _
    // Predicated region
    $region18: #{neural_network_forward.1} parent=1 // pred_check
      _
    $region19: #{neural_network_forward.1} parent=1 // pred_check_branch
      %46 = sbr.rel (0) target = $region21
    $region20: #{neural_network_forward.1} parent=1 // pred_region
      %s48 = ssub.s32 16, 16
      %49 = vsyncadd [#allocation5], %s48
      %s51 = sshll.u32 [#allocation6], 4
      %s52 = int_to_ptr.vmem [resolvable:$true] %s51
      %54 = dma.hbm_to_vmem [thread:$0]  %s4, 16, %s52, [#allocation5]
    $region21: #{neural_network_forward.1} parent=1 // pred_fallthru
      _
    // Predicated region
    $region22: #{neural_network_forward.1} parent=1 // pred_check
      _
    $region23: #{neural_network_forward.1} parent=1 // pred_check_branch
      %56 = sbr.rel (0) target = $region25
    $region24: #{neural_network_forward.1} parent=1 // pred_region
      %s58 = ssub.s32 1024, 1024
      %59 = vsyncadd [#allocation8], %s58
      %s60 = sshll.u32 [#allocation7], 4
      %s61 = int_to_ptr.vmem [resolvable:$true] %s60
      %66 = dma.hbm_to_vmem [thread:$0]  %s5, 1024, %s61, [#allocation8], 64, 64, 4
    $region25: #{neural_network_forward.1} parent=1 // pred_fallthru
      _
    // Predicated region
    $region26: #{neural_network_forward.1} parent=1 // pred_check
      _
    $region27: #{neural_network_forward.1} parent=1 // pred_check_branch
      %68 = sbr.rel (0) target = $region29
    $region28: #{neural_network_forward.1} parent=1 // pred_region
      %s70 = ssub.s32 16, 16
      %71 = vsyncadd [#allocation8], %s70
      %s73 = sshll.u32 [#allocation9], 4
      %s74 = int_to_ptr.vmem [resolvable:$true] %s73
      %76 = dma.hbm_to_vmem [thread:$0]  %s6, 16, %s74, [#allocation8]
    $region29: #{neural_network_forward.1} parent=1 // pred_fallthru
      _
    // Predicated region
    $region30: #{neural_network_forward.1} parent=1 // pred_check
      _
    $region31: #{neural_network_forward.1} parent=1 // pred_check_branch
      %78 = sbr.rel (0) target = $region33
    $region32: #{neural_network_forward.1} parent=1 // pred_region
      _
    $region33: #{neural_network_forward.1} parent=1 // pred_fallthru
      _
    // Predicated region
    $region34: #{neural_network_forward.1} parent=1 // pred_check
      _
    $region35: #{neural_network_forward.1} parent=1 // pred_check_branch
      %80 = sbr.rel (0) target = $region37
    $region36: #{neural_network_forward.1} parent=1 // pred_region
      _
    $region37: #{neural_network_forward.1} parent=1 // pred_fallthru
      _
    // Predicated region
    $region38: #{neural_network_forward.1} parent=1 // pred_check
      _
    $region39: #{neural_network_forward.1} parent=1 // pred_check_branch
      %82 = sbr.rel (0) target = $region41
    $region40: #{neural_network_forward.1} parent=1 // pred_region
      %83 = dma.done [#allocation3], 1024
    $region41: #{neural_network_forward.1} parent=1 // pred_fallthru
      _
    // Predicated region
    $region42: #{neural_network_forward.1} parent=1 // pred_check
      _
    $region43: #{neural_network_forward.1} parent=1 // pred_check_branch
      %85 = sbr.rel (0) target = $region45
    $region44: #{neural_network_forward.1} parent=1 // pred_region
      %86 = dma.done [#allocation5], 1024
    $region45: #{neural_network_forward.1} parent=1 // pred_fallthru
      _
    // Predicated region
    $region46: #{neural_network_forward.1} parent=1 // pred_check
      _
    $region47: #{neural_network_forward.1} parent=1 // pred_check_branch
      %88 = sbr.rel (0) target = $region49
    $region48: #{neural_network_forward.1} parent=1 // pred_region
      %89 = dma.done [#allocation5], 16
    $region49: #{neural_network_forward.1} parent=1 // pred_fallthru
      _
    // Predicated region
    $region50: #{neural_network_forward.1} parent=1 // pred_check
      _
    $region51: #{neural_network_forward.1} parent=1 // pred_check_branch
      %91 = sbr.rel (0) target = $region53
    $region52: #{neural_network_forward.1} parent=1 // pred_region
      %92 = dma.done [#allocation8], 1024
    $region53: #{neural_network_forward.1} parent=1 // pred_fallthru
      _
    // Predicated region
    $region54: #{neural_network_forward.1} parent=1 // pred_check
      _
    $region55: #{neural_network_forward.1} parent=1 // pred_check_branch
      %94 = sbr.rel (0) target = $region57
    $region56: #{neural_network_forward.1} parent=1 // pred_region
      %95 = dma.done [#allocation8], 16
    $region57: #{neural_network_forward.1} parent=1 // pred_fallthru
      _
    %v97 = vld [vmem:[%s0] sm:$0xf]
    %v98 = vld [vmem:[#allocation2] sm:$0xf]
    %v99 = vld [vmem:[#allocation2 + $0x4] sm:$0xf]
    %v100 = vld [vmem:[#allocation2 + $0x8] sm:$0xf]
    %v101 = vld [vmem:[#allocation2 + $0xc] sm:$0xf]
    %v102 = vld [vmem:[#allocation2 + $0x10] sm:$0xf]
    %v103 = vld [vmem:[#allocation2 + $0x14] sm:$0xf]
    %v104 = vld [vmem:[#allocation2 + $0x18] sm:$0xf]
    %v105 = vld [vmem:[#allocation2 + $0x1c] sm:$0xf]
    %v106 = vld [vmem:[#allocation2 + $0x20] sm:$0xf]
    %v107 = vld [vmem:[#allocation2 + $0x24] sm:$0xf]
    %v108 = vld [vmem:[#allocation2 + $0x28] sm:$0xf]
    %v109 = vld [vmem:[#allocation2 + $0x2c] sm:$0xf]
    %v110 = vld [vmem:[#allocation2 + $0x30] sm:$0xf]
    %v111 = vld [vmem:[#allocation2 + $0x34] sm:$0xf]
    %v112 = vld [vmem:[#allocation2 + $0x38] sm:$0xf]
    %v113 = vld [vmem:[#allocation2 + $0x3c] sm:$0xf]
    %v114 = vld [vmem:[%s2] sm:$0x1]
    %v116 = vlaneseq
    %v117 = vshrl.u32 %v116, 7
    %v118 = vsub.s32 0, %v117
    %v119 = vrot.slane %v114, %v118
    %v137 = vunpack.c.l.b16 %v98
    %v138 = vunpack.c.l.b16 %v99
    %v139 = vunpack.c.l.b16 %v100
    %v140 = vunpack.c.l.b16 %v101
    %v141 = vunpack.c.l.b16 %v102
    %v142 = vunpack.c.l.b16 %v103
    %v143 = vunpack.c.l.b16 %v104
    %v144 = vunpack.c.l.b16 %v105
    %v145 = vunpack.c.l.b16 %v106
    %v146 = vunpack.c.l.b16 %v107
    %v147 = vunpack.c.l.b16 %v108
    %v148 = vunpack.c.l.b16 %v109
    %v149 = vunpack.c.l.b16 %v110
    %v150 = vunpack.c.l.b16 %v111
    %v151 = vunpack.c.l.b16 %v112
    %v152 = vunpack.c.l.b16 %v113
    %v153 = vpack.c.b16 %v138, %v137
    %v154 = vpack.c.b16 %v140, %v139
    %v155 = vpack.c.b16 %v142, %v141
    %v156 = vpack.c.b16 %v144, %v143
    %v157 = vpack.c.b16 %v146, %v145
    %v158 = vpack.c.b16 %v148, %v147
    %v159 = vpack.c.b16 %v150, %v149
    %v160 = vpack.c.b16 %v152, %v151
    %169 = vmatprep.subr.bf16.mxu0 0
    %170 = vmatpush1.bf16.msra.mxu0 %v153
    %171 = vmatprep.subr.bf16.mxu0 0
    %172 = vmatpush1.bf16.msra.mxu0 %v154
    %173 = vmatprep.subr.bf16.mxu0 0
    %174 = vmatpush1.bf16.msra.mxu0 %v155
    %175 = vmatprep.subr.bf16.mxu0 0
    %176 = vmatpush1.bf16.msra.mxu0 %v156
    %177 = vmatprep.subr.bf16.mxu0 0
    %178 = vmatpush1.bf16.msra.mxu0 %v157
    %179 = vmatprep.subr.bf16.mxu0 0
    %180 = vmatpush1.bf16.msra.mxu0 %v158
    %181 = vmatprep.subr.bf16.mxu0 0
    %182 = vmatpush1.bf16.msra.mxu0 %v159
    %183 = vmatprep.subr.bf16.mxu0 0
    %184 = vmatpush1.bf16.msra.mxu0 %v160
    %185 = vmatprep.subr.bf16.mxu0 0
    %186 = vmatpush1.bf16.msra.mxu0 0
    %187 = vmatprep.subr.bf16.mxu0 0
    %188 = vmatpush1.bf16.msra.mxu0 0
    %189 = vmatprep.subr.bf16.mxu0 0
    %190 = vmatpush1.bf16.msra.mxu0 0
    %191 = vmatprep.subr.bf16.mxu0 0
    %192 = vmatpush1.bf16.msra.mxu0 0
    %193 = vmatprep.subr.bf16.mxu0 0
    %194 = vmatpush1.bf16.msra.mxu0 0
    %195 = vmatprep.subr.bf16.mxu0 0
    %196 = vmatpush1.bf16.msra.mxu0 0
    %197 = vmatprep.subr.bf16.mxu0 0
    %198 = vmatpush1.bf16.msra.mxu0 0
    %199 = vmatprep.subr.bf16.mxu0 0
    %200 = vmatpush1.bf16.msra.mxu0 0
    %201 = vmatprep.mubr.bf16.mxu0 0
    %202 = vmatmul.mubr.bf16.gmra.mrb[0].mxu0 %v97
    %v203 = vpop.f32.mrb[0].mxu0
    %v204 = vadd.f32 %v119, %v203
    %v205 = vpop.f32.mrb[0].mxu0
    %v206 = vpop.f32.mrb[0].mxu0
    %v207 = vpop.f32.mrb[0].mxu0
    %208 = vdwg.mxu0
    %v209 = vmax.f32 %v204, 0.0
    %v210 = vpack.c.bf16 %v209, %v209
    %v211 = vld [vmem:[#allocation4] sm:$0xf]
    %v212 = vld [vmem:[#allocation4 + $0x4] sm:$0xf]
    %v213 = vld [vmem:[#allocation4 + $0x8] sm:$0xf]
    %v214 = vld [vmem:[#allocation4 + $0xc] sm:$0xf]
    %v215 = vld [vmem:[#allocation4 + $0x10] sm:$0xf]
    %v216 = vld [vmem:[#allocation4 + $0x14] sm:$0xf]
    %v217 = vld [vmem:[#allocation4 + $0x18] sm:$0xf]
    %v218 = vld [vmem:[#allocation4 + $0x1c] sm:$0xf]
    %v219 = vld [vmem:[#allocation4 + $0x20] sm:$0xf]
    %v220 = vld [vmem:[#allocation4 + $0x24] sm:$0xf]
    %v221 = vld [vmem:[#allocation4 + $0x28] sm:$0xf]
    %v222 = vld [vmem:[#allocation4 + $0x2c] sm:$0xf]
    %v223 = vld [vmem:[#allocation4 + $0x30] sm:$0xf]
    %v224 = vld [vmem:[#allocation4 + $0x34] sm:$0xf]
    %v225 = vld [vmem:[#allocation4 + $0x38] sm:$0xf]
    %v226 = vld [vmem:[#allocation4 + $0x3c] sm:$0xf]
    %v227 = vld [vmem:[#allocation6] sm:$0x1]
    %v229 = vlaneseq
    %v230 = vshrl.u32 %v229, 7
    %v231 = vsub.s32 0, %v230
    %v232 = vrot.slane %v227, %v231
    %v250 = vunpack.c.l.b16 %v211
    %v251 = vunpack.c.l.b16 %v212
    %v252 = vunpack.c.l.b16 %v213
    %v253 = vunpack.c.l.b16 %v214
    %v254 = vunpack.c.l.b16 %v215
    %v255 = vunpack.c.l.b16 %v216
    %v256 = vunpack.c.l.b16 %v217
    %v257 = vunpack.c.l.b16 %v218
    %v258 = vunpack.c.l.b16 %v219
    %v259 = vunpack.c.l.b16 %v220
    %v260 = vunpack.c.l.b16 %v221
    %v261 = vunpack.c.l.b16 %v222
    %v262 = vunpack.c.l.b16 %v223
    %v263 = vunpack.c.l.b16 %v224
    %v264 = vunpack.c.l.b16 %v225
    %v265 = vunpack.c.l.b16 %v226
    %v266 = vpack.c.b16 %v251, %v250
    %v267 = vpack.c.b16 %v253, %v252
    %v268 = vpack.c.b16 %v255, %v254
    %v269 = vpack.c.b16 %v257, %v256
    %v270 = vpack.c.b16 %v259, %v258
    %v271 = vpack.c.b16 %v261, %v260
    %v272 = vpack.c.b16 %v263, %v262
    %v273 = vpack.c.b16 %v265, %v264
    %282 = vmatprep.subr.bf16.mxu0 0
    %283 = vmatpush1.bf16.msra.mxu0 %v266
    %284 = vmatprep.subr.bf16.mxu0 0
    %285 = vmatpush1.bf16.msra.mxu0 %v267
    %286 = vmatprep.subr.bf16.mxu0 0
    %287 = vmatpush1.bf16.msra.mxu0 %v268
    %288 = vmatprep.subr.bf16.mxu0 0
    %289 = vmatpush1.bf16.msra.mxu0 %v269
    %290 = vmatprep.subr.bf16.mxu0 0
    %291 = vmatpush1.bf16.msra.mxu0 %v270
    %292 = vmatprep.subr.bf16.mxu0 0
    %293 = vmatpush1.bf16.msra.mxu0 %v271
    %294 = vmatprep.subr.bf16.mxu0 0
    %295 = vmatpush1.bf16.msra.mxu0 %v272
    %296 = vmatprep.subr.bf16.mxu0 0
    %297 = vmatpush1.bf16.msra.mxu0 %v273
    %298 = vmatprep.subr.bf16.mxu0 0
    %299 = vmatpush1.bf16.msra.mxu0 0
    %300 = vmatprep.subr.bf16.mxu0 0
    %301 = vmatpush1.bf16.msra.mxu0 0
    %302 = vmatprep.subr.bf16.mxu0 0
    %303 = vmatpush1.bf16.msra.mxu0 0
    %304 = vmatprep.subr.bf16.mxu0 0
    %305 = vmatpush1.bf16.msra.mxu0 0
    %306 = vmatprep.subr.bf16.mxu0 0
    %307 = vmatpush1.bf16.msra.mxu0 0
    %308 = vmatprep.subr.bf16.mxu0 0
    %309 = vmatpush1.bf16.msra.mxu0 0
    %310 = vmatprep.subr.bf16.mxu0 0
    %311 = vmatpush1.bf16.msra.mxu0 0
    %312 = vmatprep.subr.bf16.mxu0 0
    %313 = vmatpush1.bf16.msra.mxu0 0
    %314 = vmatprep.mubr.bf16.mxu0 0
    %315 = vmatmul.mubr.bf16.gmra.mrb[0].mxu0 %v210
    %v316 = vpop.f32.mrb[0].mxu0
    %v317 = vadd.f32 %v232, %v316
    %v318 = vpop.f32.mrb[0].mxu0
    %v319 = vpop.f32.mrb[0].mxu0
    %v320 = vpop.f32.mrb[0].mxu0
    %321 = vdwg.mxu0
    %v322 = vmax.f32 %v317, 0.0
    %v323 = vpack.c.bf16 %v322, %v322
    %v324 = vld [vmem:[#allocation7] sm:$0xf]
    %v325 = vld [vmem:[#allocation7 + $0x4] sm:$0xf]
    %v326 = vld [vmem:[#allocation7 + $0x8] sm:$0xf]
    %v327 = vld [vmem:[#allocation7 + $0xc] sm:$0xf]
    %v328 = vld [vmem:[#allocation7 + $0x10] sm:$0xf]
    %v329 = vld [vmem:[#allocation7 + $0x14] sm:$0xf]
    %v330 = vld [vmem:[#allocation7 + $0x18] sm:$0xf]
    %v331 = vld [vmem:[#allocation7 + $0x1c] sm:$0xf]
    %v332 = vld [vmem:[#allocation7 + $0x20] sm:$0xf]
    %v333 = vld [vmem:[#allocation7 + $0x24] sm:$0xf]
    %v334 = vld [vmem:[#allocation7 + $0x28] sm:$0xf]
    %v335 = vld [vmem:[#allocation7 + $0x2c] sm:$0xf]
    %v336 = vld [vmem:[#allocation7 + $0x30] sm:$0xf]
    %v337 = vld [vmem:[#allocation7 + $0x34] sm:$0xf]
    %v338 = vld [vmem:[#allocation7 + $0x38] sm:$0xf]
    %v339 = vld [vmem:[#allocation7 + $0x3c] sm:$0xf]
    %v340 = vld [vmem:[#allocation9] sm:$0x1]
    %v342 = vlaneseq
    %v343 = vshrl.u32 %v342, 7
    %v344 = vsub.s32 0, %v343
    %v345 = vrot.slane %v340, %v344
    %v363 = vunpack.c.l.b16 %v324
    %v364 = vunpack.c.l.b16 %v325
    %v365 = vunpack.c.l.b16 %v326
    %v366 = vunpack.c.l.b16 %v327
    %v367 = vunpack.c.l.b16 %v328
    %v368 = vunpack.c.l.b16 %v329
    %v369 = vunpack.c.l.b16 %v330
    %v370 = vunpack.c.l.b16 %v331
    %v371 = vunpack.c.l.b16 %v332
    %v372 = vunpack.c.l.b16 %v333
    %v373 = vunpack.c.l.b16 %v334
    %v374 = vunpack.c.l.b16 %v335
    %v375 = vunpack.c.l.b16 %v336
    %v376 = vunpack.c.l.b16 %v337
    %v377 = vunpack.c.l.b16 %v338
    %v378 = vunpack.c.l.b16 %v339
    %v379 = vpack.c.b16 %v364, %v363
    %v380 = vpack.c.b16 %v366, %v365
    %v381 = vpack.c.b16 %v368, %v367
    %v382 = vpack.c.b16 %v370, %v369
    %v383 = vpack.c.b16 %v372, %v371
    %v384 = vpack.c.b16 %v374, %v373
    %v385 = vpack.c.b16 %v376, %v375
    %v386 = vpack.c.b16 %v378, %v377
    %395 = vmatprep.subr.bf16.mxu0 0
    %396 = vmatpush1.bf16.msra.mxu0 %v379
    %397 = vmatprep.subr.bf16.mxu0 0
    %398 = vmatpush1.bf16.msra.mxu0 %v380
    %399 = vmatprep.subr.bf16.mxu0 0
    %400 = vmatpush1.bf16.msra.mxu0 %v381
    %401 = vmatprep.subr.bf16.mxu0 0
    %402 = vmatpush1.bf16.msra.mxu0 %v382
    %403 = vmatprep.subr.bf16.mxu0 0
    %404 = vmatpush1.bf16.msra.mxu0 %v383
    %405 = vmatprep.subr.bf16.mxu0 0
    %406 = vmatpush1.bf16.msra.mxu0 %v384
    %407 = vmatprep.subr.bf16.mxu0 0
    %408 = vmatpush1.bf16.msra.mxu0 %v385
    %409 = vmatprep.subr.bf16.mxu0 0
    %410 = vmatpush1.bf16.msra.mxu0 %v386
    %411 = vmatprep.subr.bf16.mxu0 0
    %412 = vmatpush1.bf16.msra.mxu0 0
    %413 = vmatprep.subr.bf16.mxu0 0
    %414 = vmatpush1.bf16.msra.mxu0 0
    %415 = vmatprep.subr.bf16.mxu0 0
    %416 = vmatpush1.bf16.msra.mxu0 0
    %417 = vmatprep.subr.bf16.mxu0 0
    %418 = vmatpush1.bf16.msra.mxu0 0
    %419 = vmatprep.subr.bf16.mxu0 0
    %420 = vmatpush1.bf16.msra.mxu0 0
    %421 = vmatprep.subr.bf16.mxu0 0
    %422 = vmatpush1.bf16.msra.mxu0 0
    %423 = vmatprep.subr.bf16.mxu0 0
    %424 = vmatpush1.bf16.msra.mxu0 0
    %425 = vmatprep.subr.bf16.mxu0 0
    %426 = vmatpush1.bf16.msra.mxu0 0
    %427 = vmatprep.mubr.bf16.mxu0 0
    %428 = vmatmul.mubr.bf16.gmra.mrb[0].mxu0 %v323
    %v429 = vpop.f32.mrb[0].mxu0
    %v430 = vadd.f32 %v345, %v429
    %v431 = vpop.f32.mrb[0].mxu0
    %v432 = vpop.f32.mrb[0].mxu0
    %v433 = vpop.f32.mrb[0].mxu0
    %434 = vdwg.mxu0
    %v435 = vmax.f32 %v430, 0.0
    %v436 = vpack.c.bf16 %v435, %v435
    %v437 = vld [vmem:[%s7] sm:$0xf]
    %v438 = vld [vmem:[%s7 + $0x4] sm:$0xf]
    %v439 = vld [vmem:[%s7 + $0x8] sm:$0xf]
    %v440 = vld [vmem:[%s7 + $0xc] sm:$0xf]
    %v441 = vld [vmem:[%s7 + $0x10] sm:$0xf]
    %v442 = vld [vmem:[%s7 + $0x14] sm:$0xf]
    %v443 = vld [vmem:[%s7 + $0x18] sm:$0xf]
    %v444 = vld [vmem:[%s7 + $0x1c] sm:$0xf]
    %v445 = vld [vmem:[%s7 + $0x20] sm:$0xf]
    %v446 = vld [vmem:[%s7 + $0x24] sm:$0xf]
    %v447 = vld [vmem:[%s7 + $0x28] sm:$0xf]
    %v448 = vld [vmem:[%s7 + $0x2c] sm:$0xf]
    %v449 = vld [vmem:[%s7 + $0x30] sm:$0xf]
    %v450 = vld [vmem:[%s7 + $0x34] sm:$0xf]
    %v451 = vld [vmem:[%s7 + $0x38] sm:$0xf]
    %v452 = vld [vmem:[%s7 + $0x3c] sm:$0xf]
    %v453 = vld [vmem:[%s8] sm:$0x1]
    %v455 = vlaneseq
    %v456 = vshrl.u32 %v455, 7
    %v457 = vsub.s32 0, %v456
    %v458 = vrot.slane %v453, %v457
    %v476 = vunpack.c.l.b16 %v437
    %v477 = vunpack.c.l.b16 %v438
    %v478 = vunpack.c.l.b16 %v439
    %v479 = vunpack.c.l.b16 %v440
    %v480 = vunpack.c.l.b16 %v441
    %v481 = vunpack.c.l.b16 %v442
    %v482 = vunpack.c.l.b16 %v443
    %v483 = vunpack.c.l.b16 %v444
    %v484 = vunpack.c.l.b16 %v445
    %v485 = vunpack.c.l.b16 %v446
    %v486 = vunpack.c.l.b16 %v447
    %v487 = vunpack.c.l.b16 %v448
    %v488 = vunpack.c.l.b16 %v449
    %v489 = vunpack.c.l.b16 %v450
    %v490 = vunpack.c.l.b16 %v451
    %v491 = vunpack.c.l.b16 %v452
    %v492 = vpack.c.b16 %v477, %v476
    %v493 = vpack.c.b16 %v479, %v478
    %v494 = vpack.c.b16 %v481, %v480
    %v495 = vpack.c.b16 %v483, %v482
    %v496 = vpack.c.b16 %v485, %v484
    %v497 = vpack.c.b16 %v487, %v486
    %v498 = vpack.c.b16 %v489, %v488
    %v499 = vpack.c.b16 %v491, %v490
    %508 = vmatprep.subr.bf16.mxu0 0
    %509 = vmatpush1.bf16.msra.mxu0 %v492
    %510 = vmatprep.subr.bf16.mxu0 0
    %511 = vmatpush1.bf16.msra.mxu0 %v493
    %512 = vmatprep.subr.bf16.mxu0 0
    %513 = vmatpush1.bf16.msra.mxu0 %v494
    %514 = vmatprep.subr.bf16.mxu0 0
    %515 = vmatpush1.bf16.msra.mxu0 %v495
    %516 = vmatprep.subr.bf16.mxu0 0
    %517 = vmatpush1.bf16.msra.mxu0 %v496
    %518 = vmatprep.subr.bf16.mxu0 0
    %519 = vmatpush1.bf16.msra.mxu0 %v497
    %520 = vmatprep.subr.bf16.mxu0 0
    %521 = vmatpush1.bf16.msra.mxu0 %v498
    %522 = vmatprep.subr.bf16.mxu0 0
    %523 = vmatpush1.bf16.msra.mxu0 %v499
    %524 = vmatprep.subr.bf16.mxu0 0
    %525 = vmatpush1.bf16.msra.mxu0 0
    %526 = vmatprep.subr.bf16.mxu0 0
    %527 = vmatpush1.bf16.msra.mxu0 0
    %528 = vmatprep.subr.bf16.mxu0 0
    %529 = vmatpush1.bf16.msra.mxu0 0
    %530 = vmatprep.subr.bf16.mxu0 0
    %531 = vmatpush1.bf16.msra.mxu0 0
    %532 = vmatprep.subr.bf16.mxu0 0
    %533 = vmatpush1.bf16.msra.mxu0 0
    %534 = vmatprep.subr.bf16.mxu0 0
    %535 = vmatpush1.bf16.msra.mxu0 0
    %536 = vmatprep.subr.bf16.mxu0 0
    %537 = vmatpush1.bf16.msra.mxu0 0
    %538 = vmatprep.subr.bf16.mxu0 0
    %539 = vmatpush1.bf16.msra.mxu0 0
    %540 = vmatprep.mubr.bf16.mxu0 0
    %541 = vmatmul.mubr.bf16.gmra.mrb[0].mxu0 %v436
    %v542 = vpop.f32.mrb[0].mxu0
    %v543 = vadd.f32 %v458, %v542
    %v544 = vpop.f32.mrb[0].mxu0
    %v545 = vpop.f32.mrb[0].mxu0
    %v546 = vpop.f32.mrb[0].mxu0
    %547 = vdwg.mxu0
    %548 = vst [vmem:[%s9] sm:$0xff] %v543
    // Predicated region
    $region58: #{neural_network_forward.1} parent=1 // pred_check
      _
    $region59: #{neural_network_forward.1} parent=1 // pred_check_branch
      %550 = sbr.rel (0) target = $region61
    $region60: #{neural_network_forward.1} parent=1 // pred_region
      _
    $region61: #{neural_network_forward.1} parent=1 // pred_fallthru
      _
    // Predicated region
    $region62: #{neural_network_forward.1} parent=1 // pred_check
      _
    $region63: #{neural_network_forward.1} parent=1 // pred_check_branch
      %552 = sbr.rel (0) target = $region65
    $region64: #{neural_network_forward.1} parent=1 // pred_region
      _
    $region65: #{neural_network_forward.1} parent=1 // pred_fallthru
      _
    %553 = vsyncpa [#allocation3], 1
    %554 = vsyncpa [#allocation5], 1
    %555 = vsyncpa [#allocation8], 1

</llo_original>
